<compile_context>
chip_gen: v6e
topology: v6e:2x2x1
jax: 0.10.0
libtpu: 0.0.40
codegen_flags: <defaults>
</compile_context>

<pallas_src>
import functools

import jax
import jax.numpy as jnp
from jax.experimental import pallas as pl
from jax.experimental.pallas import tpu as pltpu

_MIB = 1024 * 1024


# ---------------------------------------------------------------------------
# VMEM budgeting (per-generation, derived from the physical capacity)
# ---------------------------------------------------------------------------
def _tpu_vmem_capacity_bytes():
    """Physical VMEM per core (128 MiB on v5e/v6e, 64 MiB on v7x)."""
    try:
        info = pltpu.get_tpu_info()
        cap = int(getattr(info, "vmem_capacity_bytes", 0) or 0)
        if cap > 0:
            return cap
    except Exception:
        pass
    return 64 * _MIB  # conservative (v7x-sized) fallback


def _default_vmem_budget_bytes(capacity_bytes):
    """Working-set budget for the double-buffered tiles (not the physical size)."""
    if capacity_bytes >= 96 * _MIB:        # v5e / v6e: 128 MiB physical
        return 64 * _MIB
    # v7x-class parts (64 MiB physical): stay well below physical so the compiler
    # keeps headroom for its own scratch and never spills.
    return min(40 * _MIB, (capacity_bytes * 5) // 8)


def _sublane_granule(dtype):
    # bf16 packs two rows per sublane ((16,128) native tiles) -> 16; 32-bit -> 8.
    return 16 if jnp.dtype(dtype).itemsize < 4 else 8


def _pick_plane_block(n_planes, per_plane_bytes, resident_bytes, budget_bytes,
                      granule, target_steps=8):
    """Planes (N*C rows) per grid step.

      * memory:   double-buffered tiles + resident bytes must fit the budget
      * megacore: aim for >= target_steps grid steps (>= 4 per v7x TensorCore)
                  whenever n_planes allows, so DMA overlaps compute
      * layout:   second-to-last block dim is a multiple of `granule` or the
                  full array dim (never an illegal small block)
    """
    avail = budget_bytes - resident_bytes
    min_cb = min(granule, n_planes)
    assert avail >= min_cb * per_plane_bytes, (
        "VMEM budget too small for one sublane-granule of planes; re-tile the "
        "spatial axis (second grid dimension) instead of shrinking the plane block"
    )
    cb = min(n_planes, avail // per_plane_bytes)
    if n_planes >= target_steps * granule:
        cb = min(cb, pl.cdiv(n_planes, target_steps))
    if cb < n_planes:
        cb = (cb // granule) * granule       # guaranteed >= granule here
    else:
        cb = n_planes
    return int(cb)


# ---------------------------------------------------------------------------
# Selection matrices (exact 0/1 replication operators)
# ---------------------------------------------------------------------------
def _selection_matrix_w(W, s, dtype):
    """(W, W*s) 0/1 matrix: M[wi, wo] = [wi == wo // s]  (W-axis replication)."""
    wo = jnp.arange(W * s)
    wi = jnp.arange(W)
    return (wi[:, None] == (wo[None, :] // s)).astype(dtype)


def _selection_matrix_full(H, W, s, dtype):
    """(H*W, Hs*Ws) 0/1 matrix for the flattened-plane nearest upsample."""
    Hs, Ws = H * s, W * s
    ho = jnp.arange(Hs)
    wo = jnp.arange(Ws)
    src = ((ho[:, None] // s) * W + (wo[None, :] // s)).reshape(Hs * Ws)
    return (jnp.arange(H * W)[:, None] == src[None, :]).astype(dtype)


# ---------------------------------------------------------------------------
# Kernel 1: nearest-neighbor upsample (integer scale factor)
# ---------------------------------------------------------------------------
def _upsample_mxu_kernel(x_ref, m_ref, o_ref):
    # bf16 path: x_ref (cb, H*W), m_ref (H*W, Hs*Ws) 0/1 bf16, o_ref (cb, Hs*Ws).
    # One lane-dense MXU matmul, exact for a 0/1 selection with f32 accumulation.
    o_ref[...] = jnp.dot(
        x_ref[...], m_ref[...], preferred_element_type=jnp.float32
    ).astype(o_ref.dtype)


def _upsample_f32_kernel(x_ref, m_ref, o_ref, *, H, W, s):
    # f32 path: exact, small-contraction replication.
    #   x (cb, H*W) is split exactly into three bf16 components (hi+mid+lo == x),
    #   W-replication is a (cb, 3W) @ (3W, Ws) 0/1 bf16 matmul (f32 accumulate),
    #   H-replication is a free lane concatenation of identical row blocks.
    # ~2*3*W FLOPs per output element (vs 2*H*W for the single big matmul) and
    # exact regardless of how the MXU handles f32 operands.
    x = x_ref[...]                                   # (cb, H*W) float32
    hi = x.astype(jnp.bfloat16)
    r1 = x - hi.astype(jnp.float32)                  # exact residual
    md = r1.astype(jnp.bfloat16)
    lo = (r1 - md.astype(jnp.float32)).astype(jnp.bfloat16)
    m = m_ref[...]                                   # (3*W, Ws) bf16 0/1
    pieces = []
    for h in range(H):                               # static unroll (small H)
        sl = slice(h * W, (h + 1) * W)
        xr = jnp.concatenate([hi[:, sl], md[:, sl], lo[:, sl]], axis=-1)  # (cb, 3W)
        y = jnp.dot(xr, m, preferred_element_type=jnp.float32)            # (cb, Ws)
        pieces.extend([y] * s)                       # H-axis replication
    o_ref[...] = jnp.concatenate(pieces, axis=-1).astype(o_ref.dtype)     # (cb, Hs*Ws)


def upsample_nearest(x, scale_factor, *, vmem_budget_bytes=None):
    """x: (N, C, H, W) -> (N, C, H*s, W*s), nearest-neighbor, integer scale (NCHW)."""
    assert float(scale_factor) == int(scale_factor), (
        "nearest-upsample kernel expects an integer scale factor"
    )
    s = int(scale_factor)
    if s == 1:
        return x
    assert x.dtype in (jnp.float32, jnp.bfloat16), (
        "upsample_nearest supports float32 / bfloat16, got %s" % x.dtype
    )

    N, C, H, W = x.shape
    Hs, Ws = H * s, W * s
    NC, HW, HsWs = N * C, H * W, Hs * Ws
    itemsize = jnp.dtype(x.dtype).itemsize

    # TODO(synk): for H*W / Hs*Ws that are not multiples of 128 (e.g. 13x13 / 19x19
    # YOLO maps) pad the flattened spatial axis to a lane multiple in the wrapper
    # so output stores stay unmasked; not needed at these sizes.
    cap = _tpu_vmem_capacity_bytes()
    budget = (vmem_budget_bytes if vmem_budget_bytes is not None
              else _default_vmem_budget_bytes(cap))

    if x.dtype == jnp.bfloat16:
        # Native bf16: single lane-dense selection matmul (review option (a)).
        M = _selection_matrix_full(H, W, s, jnp.bfloat16)
        kernel = _upsample_mxu_kernel
        flops = 2 * NC * HW * HsWs
    else:
        # float32: exact small-contraction path (review option (b)).
        M = jnp.concatenate([_selection_matrix_w(W, s, jnp.bfloat16)] * 3, axis=0)
        kernel = functools.partial(_upsample_f32_kernel, H=H, W=W, s=s)
        flops = 2 * NC * HsWs * 3 * W

    # TODO(synk): the constant selection matrix is still double-buffered by the
    # default pipeline; single-buffering it (pl.Buffered(1) / scratch DMA) would
    # free M.nbytes of VMEM for larger plane blocks.
    m_resident = 2 * M.size * M.dtype.itemsize
    # double-buffered in/out tiles + ~2 output-tile-sized in-kernel temporaries
    per_plane = (2 * HW + 4 * HsWs) * itemsize
    granule = _sublane_granule(x.dtype)
    cb = _pick_plane_block(NC, per_plane, m_resident, budget, granule)

    footprint = cb * per_plane + m_resident
    vmem_limit = int(min(cap, max(footprint + 4 * _MIB, 16 * _MIB)))

    xf = x.reshape(NC, HW)          # row-major reshape: free view in HBM

    out = pl.pallas_call(
        kernel,
        out_shape=jax.ShapeDtypeStruct((NC, HsWs), x.dtype),
        grid=(pl.cdiv(NC, cb),),
        in_specs=[
            pl.BlockSpec((cb, HW), lambda i: (i, 0)),
            pl.BlockSpec(M.shape, lambda i: (0, 0)),
        ],
        out_specs=pl.BlockSpec((cb, HsWs), lambda i: (i, 0)),
        compiler_params=pltpu.CompilerParams(
            dimension_semantics=("parallel",),
            vmem_limit_bytes=vmem_limit,
        ),
        cost_estimate=pl.CostEstimate(
            flops=int(flops),
            transcendentals=0,
            bytes_accessed=int((NC * HW + NC * HsWs) * itemsize
                               + M.size * M.dtype.itemsize),
        ),
    )(xf, M)

    return out.reshape(N, C, Hs, Ws)


# ---------------------------------------------------------------------------
# Kernel 2: full SPP.forward for size=None (global avg-pool + nearest interp back)
# ---------------------------------------------------------------------------
def _spp_global_kernel(x_ref, o_ref):
    # avg_pool2d over the full (H, W) plane followed by nearest interpolation back
    # == broadcast the per-plane mean.  f32 accumulation without materializing an
    # f32 copy of the whole tile.
    mean = jnp.mean(x_ref[...], axis=-1, keepdims=True, dtype=jnp.float32)  # (cb, 1)
    o_ref[...] = jnp.broadcast_to(mean.astype(o_ref.dtype), o_ref.shape)


def spp_forward(x, size=None, *, vmem_budget_bytes=None):
    """Pallas equivalent of SPP.forward (default size=None path)."""
    if size is not None:
        # TODO(synk): SPP(size != None) needs AvgPool2d(size) + Conv2d/BatchNorm/ReLU;
        # only the default size=None branch is implemented as a Pallas kernel.
        raise NotImplementedError("SPP with size != None is not implemented")

    N, C, H, W = x.shape
    NC, HW = N * C, H * W
    itemsize = jnp.dtype(x.dtype).itemsize

    cap = _tpu_vmem_capacity_bytes()
    budget = (vmem_budget_bytes if vmem_budget_bytes is not None
              else _default_vmem_budget_bytes(cap))
    per_plane = 4 * HW * itemsize            # double-buffered input + output tiles
    granule = _sublane_granule(x.dtype)
    cb = _pick_plane_block(NC, per_plane, 0, budget, granule)

    footprint = cb * per_plane
    vmem_limit = int(min(cap, max(footprint + 4 * _MIB, 16 * _MIB)))

    xf = x.reshape(NC, HW)                   # row-major reshape: free view in HBM

    out = pl.pallas_call(
        _spp_global_kernel,
        out_shape=jax.ShapeDtypeStruct((NC, HW), x.dtype),
        grid=(pl.cdiv(NC, cb),),
        in_specs=[pl.BlockSpec((cb, HW), lambda i: (i, 0))],
        out_specs=pl.BlockSpec((cb, HW), lambda i: (i, 0)),
        compiler_params=pltpu.CompilerParams(
            dimension_semantics=("parallel",),
            vmem_limit_bytes=vmem_limit,
        ),
        cost_estimate=pl.CostEstimate(
            flops=2 * NC * HW,
            transcendentals=0,
            bytes_accessed=2 * NC * HW * itemsize,
        ),
    )(xf)

    return out.reshape(N, C, H, W)


if __name__ == "__main__":
    key = jax.random.PRNGKey(0)
    x = jax.random.normal(key, (2, 4, 16, 16), dtype=jnp.float32)
    scale_factor = 2

    # 1) nearest-upsample building block, float32 (exact small-contraction path)
    y = jax.block_until_ready(upsample_nearest(x, scale_factor))
    y_ref = jnp.repeat(jnp.repeat(x, scale_factor, axis=2), scale_factor, axis=3)
    assert y.shape == (2, 4, 32, 32), y.shape
    assert jnp.allclose(y, y_ref, atol=1e-5, rtol=1e-5), "f32 upsample mismatch"

    # 1b) nearest-upsample, bfloat16 (single lane-dense selection matmul path)
    xb = x.astype(jnp.bfloat16)
    yb = jax.block_until_ready(upsample_nearest(xb, scale_factor))
    yb_ref = jnp.repeat(jnp.repeat(xb, scale_factor, axis=2), scale_factor, axis=3)
    assert yb.dtype == jnp.bfloat16 and yb.shape == (2, 4, 32, 32), yb.shape
    assert jnp.allclose(yb.astype(jnp.float32), yb_ref.astype(jnp.float32),
                        atol=1e-2, rtol=1e-2), "bf16 upsample mismatch"

    # 2) full SPP.forward (size=None): global avg-pool then nearest interp back
    z = jax.block_until_ready(spp_forward(x))
    z_ref = jnp.broadcast_to(jnp.mean(x, axis=(2, 3), keepdims=True), x.shape)
    assert z.shape == x.shape, z.shape
    assert jnp.allclose(z, z_ref, atol=1e-5, rtol=1e-5), "SPP forward mismatch"

    print("KERNEL_OK")
</pallas_src>

<mosaic_0001>
module attributes {stable_mosaic.version = 11 : i64} {
  func.func @_upsample_f32_kernel(%arg0: i32, %arg1: memref<8x256xf32, #tpu.memory_space<vmem>>, %arg2: memref<48x32xbf16, #tpu.memory_space<vmem>>, %arg3: memref<8x1024xf32, #tpu.memory_space<vmem>>) attributes {dimension_semantics = [#tpu.dimension_semantics<parallel>], iteration_bounds = array<i64: 1>, scalar_prefetch = 0 : i64, scratch_operands = 0 : i64, tpu.core_type = #tpu.core_type<tc>, window_params = [{transform_indices = @transform_0, window_bounds = array<i64: 8, 256>}, {pipeline_mode = #tpu.pipeline_mode<synchronous>, transform_indices = @transform_1, window_bounds = array<i64: 48, 32>}, {transform_indices = @transform_2, window_bounds = array<i64: 8, 1024>}]} {
    %c0 = arith.constant 0 : index
    %c0_0 = arith.constant 0 : index
    %0 = vector.load %arg1[%c0, %c0_0] : memref<8x256xf32, #tpu.memory_space<vmem>>, vector<8x256xf32>
    %1 = arith.truncf %0 : vector<8x256xf32> to vector<8x256xbf16>
    %2 = arith.extf %1 : vector<8x256xbf16> to vector<8x256xf32>
    %3 = arith.subf %0, %2 : vector<8x256xf32>
    %4 = arith.truncf %3 : vector<8x256xf32> to vector<8x256xbf16>
    %5 = arith.extf %4 : vector<8x256xbf16> to vector<8x256xf32>
    %6 = arith.subf %3, %5 : vector<8x256xf32>
    %7 = arith.truncf %6 : vector<8x256xf32> to vector<8x256xbf16>
    %c0_1 = arith.constant 0 : index
    %c0_2 = arith.constant 0 : index
    %8 = vector.load %arg2[%c0_1, %c0_2] : memref<48x32xbf16, #tpu.memory_space<vmem>>, vector<48x32xbf16>
    %9 = vector.extract_strided_slice %1 {offsets = [0, 0], sizes = [8, 16], strides = [1, 1]} : vector<8x256xbf16> to vector<8x16xbf16>
    %10 = vector.extract_strided_slice %4 {offsets = [0, 0], sizes = [8, 16], strides = [1, 1]} : vector<8x256xbf16> to vector<8x16xbf16>
    %11 = vector.extract_strided_slice %7 {offsets = [0, 0], sizes = [8, 16], strides = [1, 1]} : vector<8x256xbf16> to vector<8x16xbf16>
    %12 = tpu.concatenate %9, %10, %11 in 1 : vector<8x16xbf16>, vector<8x16xbf16>, vector<8x16xbf16> -> vector<8x48xbf16>
    %cst = arith.constant dense<0.000000e+00> : vector<8x32xf32>
    %13 = tpu.matmul %12, %8, %cst {dimension_numbers = #tpu.dot_dimension_numbers<[1], [0], [0], [1], [0, 0, 1, 1], [], []>} : vector<8x48xbf16>, vector<48x32xbf16>, vector<8x32xf32> -> vector<8x32xf32>
    %14 = vector.extract_strided_slice %1 {offsets = [0, 16], sizes = [8, 16], strides = [1, 1]} : vector<8x256xbf16> to vector<8x16xbf16>
    %15 = vector.extract_strided_slice %4 {offsets = [0, 16], sizes = [8, 16], strides = [1, 1]} : vector<8x256xbf16> to vector<8x16xbf16>
    %16 = vector.extract_strided_slice %7 {offsets = [0, 16], sizes = [8, 16], strides = [1, 1]} : vector<8x256xbf16> to vector<8x16xbf16>
    %17 = tpu.concatenate %14, %15, %16 in 1 : vector<8x16xbf16>, vector<8x16xbf16>, vector<8x16xbf16> -> vector<8x48xbf16>
    %cst_3 = arith.constant dense<0.000000e+00> : vector<8x32xf32>
    %18 = tpu.matmul %17, %8, %cst_3 {dimension_numbers = #tpu.dot_dimension_numbers<[1], [0], [0], [1], [0, 0, 1, 1], [], []>} : vector<8x48xbf16>, vector<48x32xbf16>, vector<8x32xf32> -> vector<8x32xf32>
    %19 = vector.extract_strided_slice %1 {offsets = [0, 32], sizes = [8, 16], strides = [1, 1]} : vector<8x256xbf16> to vector<8x16xbf16>
    %20 = vector.extract_strided_slice %4 {offsets = [0, 32], sizes = [8, 16], strides = [1, 1]} : vector<8x256xbf16> to vector<8x16xbf16>
    %21 = vector.extract_strided_slice %7 {offsets = [0, 32], sizes = [8, 16], strides = [1, 1]} : vector<8x256xbf16> to vector<8x16xbf16>
    %22 = tpu.concatenate %19, %20, %21 in 1 : vector<8x16xbf16>, vector<8x16xbf16>, vector<8x16xbf16> -> vector<8x48xbf16>
    %cst_4 = arith.constant dense<0.000000e+00> : vector<8x32xf32>
    %23 = tpu.matmul %22, %8, %cst_4 {dimension_numbers = #tpu.dot_dimension_numbers<[1], [0], [0], [1], [0, 0, 1, 1], [], []>} : vector<8x48xbf16>, vector<48x32xbf16>, vector<8x32xf32> -> vector<8x32xf32>
    %24 = vector.extract_strided_slice %1 {offsets = [0, 48], sizes = [8, 16], strides = [1, 1]} : vector<8x256xbf16> to vector<8x16xbf16>
    %25 = vector.extract_strided_slice %4 {offsets = [0, 48], sizes = [8, 16], strides = [1, 1]} : vector<8x256xbf16> to vector<8x16xbf16>
    %26 = vector.extract_strided_slice %7 {offsets = [0, 48], sizes = [8, 16], strides = [1, 1]} : vector<8x256xbf16> to vector<8x16xbf16>
    %27 = tpu.concatenate %24, %25, %26 in 1 : vector<8x16xbf16>, vector<8x16xbf16>, vector<8x16xbf16> -> vector<8x48xbf16>
    %cst_5 = arith.constant dense<0.000000e+00> : vector<8x32xf32>
    %28 = tpu.matmul %27, %8, %cst_5 {dimension_numbers = #tpu.dot_dimension_numbers<[1], [0], [0], [1], [0, 0, 1, 1], [], []>} : vector<8x48xbf16>, vector<48x32xbf16>, vector<8x32xf32> -> vector<8x32xf32>
    %29 = vector.extract_strided_slice %1 {offsets = [0, 64], sizes = [8, 16], strides = [1, 1]} : vector<8x256xbf16> to vector<8x16xbf16>
    %30 = vector.extract_strided_slice %4 {offsets = [0, 64], sizes = [8, 16], strides = [1, 1]} : vector<8x256xbf16> to vector<8x16xbf16>
    %31 = vector.extract_strided_slice %7 {offsets = [0, 64], sizes = [8, 16], strides = [1, 1]} : vector<8x256xbf16> to vector<8x16xbf16>
    %32 = tpu.concatenate %29, %30, %31 in 1 : vector<8x16xbf16>, vector<8x16xbf16>, vector<8x16xbf16> -> vector<8x48xbf16>
    %cst_6 = arith.constant dense<0.000000e+00> : vector<8x32xf32>
    %33 = tpu.matmul %32, %8, %cst_6 {dimension_numbers = #tpu.dot_dimension_numbers<[1], [0], [0], [1], [0, 0, 1, 1], [], []>} : vector<8x48xbf16>, vector<48x32xbf16>, vector<8x32xf32> -> vector<8x32xf32>
    %34 = vector.extract_strided_slice %1 {offsets = [0, 80], sizes = [8, 16], strides = [1, 1]} : vector<8x256xbf16> to vector<8x16xbf16>
    %35 = vector.extract_strided_slice %4 {offsets = [0, 80], sizes = [8, 16], strides = [1, 1]} : vector<8x256xbf16> to vector<8x16xbf16>
    %36 = vector.extract_strided_slice %7 {offsets = [0, 80], sizes = [8, 16], strides = [1, 1]} : vector<8x256xbf16> to vector<8x16xbf16>
    %37 = tpu.concatenate %34, %35, %36 in 1 : vector<8x16xbf16>, vector<8x16xbf16>, vector<8x16xbf16> -> vector<8x48xbf16>
    %cst_7 = arith.constant dense<0.000000e+00> : vector<8x32xf32>
    %38 = tpu.matmul %37, %8, %cst_7 {dimension_numbers = #tpu.dot_dimension_numbers<[1], [0], [0], [1], [0, 0, 1, 1], [], []>} : vector<8x48xbf16>, vector<48x32xbf16>, vector<8x32xf32> -> vector<8x32xf32>
    %39 = vector.extract_strided_slice %1 {offsets = [0, 96], sizes = [8, 16], strides = [1, 1]} : vector<8x256xbf16> to vector<8x16xbf16>
    %40 = vector.extract_strided_slice %4 {offsets = [0, 96], sizes = [8, 16], strides = [1, 1]} : vector<8x256xbf16> to vector<8x16xbf16>
    %41 = vector.extract_strided_slice %7 {offsets = [0, 96], sizes = [8, 16], strides = [1, 1]} : vector<8x256xbf16> to vector<8x16xbf16>
    %42 = tpu.concatenate %39, %40, %41 in 1 : vector<8x16xbf16>, vector<8x16xbf16>, vector<8x16xbf16> -> vector<8x48xbf16>
    %cst_8 = arith.constant dense<0.000000e+00> : vector<8x32xf32>
    %43 = tpu.matmul %42, %8, %cst_8 {dimension_numbers = #tpu.dot_dimension_numbers<[1], [0], [0], [1], [0, 0, 1, 1], [], []>} : vector<8x48xbf16>, vector<48x32xbf16>, vector<8x32xf32> -> vector<8x32xf32>
    %44 = vector.extract_strided_slice %1 {offsets = [0, 112], sizes = [8, 16], strides = [1, 1]} : vector<8x256xbf16> to vector<8x16xbf16>
    %45 = vector.extract_strided_slice %4 {offsets = [0, 112], sizes = [8, 16], strides = [1, 1]} : vector<8x256xbf16> to vector<8x16xbf16>
    %46 = vector.extract_strided_slice %7 {offsets = [0, 112], sizes = [8, 16], strides = [1, 1]} : vector<8x256xbf16> to vector<8x16xbf16>
    %47 = tpu.concatenate %44, %45, %46 in 1 : vector<8x16xbf16>, vector<8x16xbf16>, vector<8x16xbf16> -> vector<8x48xbf16>
    %cst_9 = arith.constant dense<0.000000e+00> : vector<8x32xf32>
    %48 = tpu.matmul %47, %8, %cst_9 {dimension_numbers = #tpu.dot_dimension_numbers<[1], [0], [0], [1], [0, 0, 1, 1], [], []>} : vector<8x48xbf16>, vector<48x32xbf16>, vector<8x32xf32> -> vector<8x32xf32>
    %49 = vector.extract_strided_slice %1 {offsets = [0, 128], sizes = [8, 16], strides = [1, 1]} : vector<8x256xbf16> to vector<8x16xbf16>
    %50 = vector.extract_strided_slice %4 {offsets = [0, 128], sizes = [8, 16], strides = [1, 1]} : vector<8x256xbf16> to vector<8x16xbf16>
    %51 = vector.extract_strided_slice %7 {offsets = [0, 128], sizes = [8, 16], strides = [1, 1]} : vector<8x256xbf16> to vector<8x16xbf16>
    %52 = tpu.concatenate %49, %50, %51 in 1 : vector<8x16xbf16>, vector<8x16xbf16>, vector<8x16xbf16> -> vector<8x48xbf16>
    %cst_10 = arith.constant dense<0.000000e+00> : vector<8x32xf32>
    %53 = tpu.matmul %52, %8, %cst_10 {dimension_numbers = #tpu.dot_dimension_numbers<[1], [0], [0], [1], [0, 0, 1, 1], [], []>} : vector<8x48xbf16>, vector<48x32xbf16>, vector<8x32xf32> -> vector<8x32xf32>
    %54 = vector.extract_strided_slice %1 {offsets = [0, 144], sizes = [8, 16], strides = [1, 1]} : vector<8x256xbf16> to vector<8x16xbf16>
    %55 = vector.extract_strided_slice %4 {offsets = [0, 144], sizes = [8, 16], strides = [1, 1]} : vector<8x256xbf16> to vector<8x16xbf16>
    %56 = vector.extract_strided_slice %7 {offsets = [0, 144], sizes = [8, 16], strides = [1, 1]} : vector<8x256xbf16> to vector<8x16xbf16>
    %57 = tpu.concatenate %54, %55, %56 in 1 : vector<8x16xbf16>, vector<8x16xbf16>, vector<8x16xbf16> -> vector<8x48xbf16>
    %cst_11 = arith.constant dense<0.000000e+00> : vector<8x32xf32>
    %58 = tpu.matmul %57, %8, %cst_11 {dimension_numbers = #tpu.dot_dimension_numbers<[1], [0], [0], [1], [0, 0, 1, 1], [], []>} : vector<8x48xbf16>, vector<48x32xbf16>, vector<8x32xf32> -> vector<8x32xf32>
    %59 = vector.extract_strided_slice %1 {offsets = [0, 160], sizes = [8, 16], strides = [1, 1]} : vector<8x256xbf16> to vector<8x16xbf16>
    %60 = vector.extract_strided_slice %4 {offsets = [0, 160], sizes = [8, 16], strides = [1, 1]} : vector<8x256xbf16> to vector<8x16xbf16>
    %61 = vector.extract_strided_slice %7 {offsets = [0, 160], sizes = [8, 16], strides = [1, 1]} : vector<8x256xbf16> to vector<8x16xbf16>
    %62 = tpu.concatenate %59, %60, %61 in 1 : vector<8x16xbf16>, vector<8x16xbf16>, vector<8x16xbf16> -> vector<8x48xbf16>
    %cst_12 = arith.constant dense<0.000000e+00> : vector<8x32xf32>
    %63 = tpu.matmul %62, %8, %cst_12 {dimension_numbers = #tpu.dot_dimension_numbers<[1], [0], [0], [1], [0, 0, 1, 1], [], []>} : vector<8x48xbf16>, vector<48x32xbf16>, vector<8x32xf32> -> vector<8x32xf32>
    %64 = vector.extract_strided_slice %1 {offsets = [0, 176], sizes = [8, 16], strides = [1, 1]} : vector<8x256xbf16> to vector<8x16xbf16>
    %65 = vector.extract_strided_slice %4 {offsets = [0, 176], sizes = [8, 16], strides = [1, 1]} : vector<8x256xbf16> to vector<8x16xbf16>
    %66 = vector.extract_strided_slice %7 {offsets = [0, 176], sizes = [8, 16], strides = [1, 1]} : vector<8x256xbf16> to vector<8x16xbf16>
    %67 = tpu.concatenate %64, %65, %66 in 1 : vector<8x16xbf16>, vector<8x16xbf16>, vector<8x16xbf16> -> vector<8x48xbf16>
    %cst_13 = arith.constant dense<0.000000e+00> : vector<8x32xf32>
    %68 = tpu.matmul %67, %8, %cst_13 {dimension_numbers = #tpu.dot_dimension_numbers<[1], [0], [0], [1], [0, 0, 1, 1], [], []>} : vector<8x48xbf16>, vector<48x32xbf16>, vector<8x32xf32> -> vector<8x32xf32>
    %69 = vector.extract_strided_slice %1 {offsets = [0, 192], sizes = [8, 16], strides = [1, 1]} : vector<8x256xbf16> to vector<8x16xbf16>
    %70 = vector.extract_strided_slice %4 {offsets = [0, 192], sizes = [8, 16], strides = [1, 1]} : vector<8x256xbf16> to vector<8x16xbf16>
    %71 = vector.extract_strided_slice %7 {offsets = [0, 192], sizes = [8, 16], strides = [1, 1]} : vector<8x256xbf16> to vector<8x16xbf16>
    %72 = tpu.concatenate %69, %70, %71 in 1 : vector<8x16xbf16>, vector<8x16xbf16>, vector<8x16xbf16> -> vector<8x48xbf16>
    %cst_14 = arith.constant dense<0.000000e+00> : vector<8x32xf32>
    %73 = tpu.matmul %72, %8, %cst_14 {dimension_numbers = #tpu.dot_dimension_numbers<[1], [0], [0], [1], [0, 0, 1, 1], [], []>} : vector<8x48xbf16>, vector<48x32xbf16>, vector<8x32xf32> -> vector<8x32xf32>
    %74 = vector.extract_strided_slice %1 {offsets = [0, 208], sizes = [8, 16], strides = [1, 1]} : vector<8x256xbf16> to vector<8x16xbf16>
    %75 = vector.extract_strided_slice %4 {offsets = [0, 208], sizes = [8, 16], strides = [1, 1]} : vector<8x256xbf16> to vector<8x16xbf16>
    %76 = vector.extract_strided_slice %7 {offsets = [0, 208], sizes = [8, 16], strides = [1, 1]} : vector<8x256xbf16> to vector<8x16xbf16>
    %77 = tpu.concatenate %74, %75, %76 in 1 : vector<8x16xbf16>, vector<8x16xbf16>, vector<8x16xbf16> -> vector<8x48xbf16>
    %cst_15 = arith.constant dense<0.000000e+00> : vector<8x32xf32>
    %78 = tpu.matmul %77, %8, %cst_15 {dimension_numbers = #tpu.dot_dimension_numbers<[1], [0], [0], [1], [0, 0, 1, 1], [], []>} : vector<8x48xbf16>, vector<48x32xbf16>, vector<8x32xf32> -> vector<8x32xf32>
    %79 = vector.extract_strided_slice %1 {offsets = [0, 224], sizes = [8, 16], strides = [1, 1]} : vector<8x256xbf16> to vector<8x16xbf16>
    %80 = vector.extract_strided_slice %4 {offsets = [0, 224], sizes = [8, 16], strides = [1, 1]} : vector<8x256xbf16> to vector<8x16xbf16>
    %81 = vector.extract_strided_slice %7 {offsets = [0, 224], sizes = [8, 16], strides = [1, 1]} : vector<8x256xbf16> to vector<8x16xbf16>
    %82 = tpu.concatenate %79, %80, %81 in 1 : vector<8x16xbf16>, vector<8x16xbf16>, vector<8x16xbf16> -> vector<8x48xbf16>
    %cst_16 = arith.constant dense<0.000000e+00> : vector<8x32xf32>
    %83 = tpu.matmul %82, %8, %cst_16 {dimension_numbers = #tpu.dot_dimension_numbers<[1], [0], [0], [1], [0, 0, 1, 1], [], []>} : vector<8x48xbf16>, vector<48x32xbf16>, vector<8x32xf32> -> vector<8x32xf32>
    %84 = vector.extract_strided_slice %1 {offsets = [0, 240], sizes = [8, 16], strides = [1, 1]} : vector<8x256xbf16> to vector<8x16xbf16>
    %85 = vector.extract_strided_slice %4 {offsets = [0, 240], sizes = [8, 16], strides = [1, 1]} : vector<8x256xbf16> to vector<8x16xbf16>
    %86 = vector.extract_strided_slice %7 {offsets = [0, 240], sizes = [8, 16], strides = [1, 1]} : vector<8x256xbf16> to vector<8x16xbf16>
    %87 = tpu.concatenate %84, %85, %86 in 1 : vector<8x16xbf16>, vector<8x16xbf16>, vector<8x16xbf16> -> vector<8x48xbf16>
    %cst_17 = arith.constant dense<0.000000e+00> : vector<8x32xf32>
    %88 = tpu.matmul %87, %8, %cst_17 {dimension_numbers = #tpu.dot_dimension_numbers<[1], [0], [0], [1], [0, 0, 1, 1], [], []>} : vector<8x48xbf16>, vector<48x32xbf16>, vector<8x32xf32> -> vector<8x32xf32>
    %89 = tpu.concatenate %13, %13, %18, %18, %23, %23, %28, %28, %33, %33, %38, %38, %43, %43, %48, %48 in 1 : vector<8x32xf32>, vector<8x32xf32>, vector<8x32xf32>, vector<8x32xf32>, vector<8x32xf32>, vector<8x32xf32>, vector<8x32xf32>, vector<8x32xf32>, vector<8x32xf32>, vector<8x32xf32>, vector<8x32xf32>, vector<8x32xf32>, vector<8x32xf32>, vector<8x32xf32>, vector<8x32xf32>, vector<8x32xf32> -> vector<8x512xf32>
    %90 = tpu.concatenate %53, %53, %58, %58, %63, %63, %68, %68, %73, %73, %78, %78, %83, %83, %88, %88 in 1 : vector<8x32xf32>, vector<8x32xf32>, vector<8x32xf32>, vector<8x32xf32>, vector<8x32xf32>, vector<8x32xf32>, vector<8x32xf32>, vector<8x32xf32>, vector<8x32xf32>, vector<8x32xf32>, vector<8x32xf32>, vector<8x32xf32>, vector<8x32xf32>, vector<8x32xf32>, vector<8x32xf32>, vector<8x32xf32> -> vector<8x512xf32>
    %91 = tpu.concatenate %89, %90 in 1 : vector<8x512xf32>, vector<8x512xf32> -> vector<8x1024xf32>
    %c0_18 = arith.constant 0 : index
    %c0_19 = arith.constant 0 : index
    %92 = vector.load %arg3[%c0_18, %c0_19] : memref<8x1024xf32, #tpu.memory_space<vmem>>, vector<8x1024xf32>
    tpu.vector_store %arg3[%c0_18, %c0_19], %91 {strides = array<i32>} : memref<8x1024xf32, #tpu.memory_space<vmem>>, vector<8x1024xf32>,
    return
  }
  func.func @transform_0(%arg0: i32) -> (i32, i32) {
    %c0_i32 = arith.constant 0 : i32
    %c0_i32_0 = arith.constant 0 : i32
    return %arg0, %c0_i32 : i32, i32
  }
  func.func @transform_1(%arg0: i32) -> (i32, i32) {
    %c0_i32 = arith.constant 0 : i32
    %c0_i32_0 = arith.constant 0 : i32
    %c0_i32_1 = arith.constant 0 : i32
    return %c0_i32, %c0_i32_0 : i32, i32
  }
  func.func @transform_2(%arg0: i32) -> (i32, i32) {
    %c0_i32 = arith.constant 0 : i32
    %c0_i32_0 = arith.constant 0 : i32
    return %arg0, %c0_i32 : i32, i32
  }
}

</mosaic_0001>

<llo_original>
// kernel: tpu_custom_call.1
$region0: #{tpu_custom_call.1}
  #allocation0 [shape = 'u32[]', space=smem, size = 0x4, offset = 0x4, fixed_abs, tag = 'smem constant byte address 0x4 - core index']
  #allocation1 [shape = 'u32[144,128]{1,0:T(1,128)}', space=vmem, size = 0x12000, scoped, tag = 'internal scratch']
  %s0 = inlined_call_operand.vmem [shape: f32[8,256], index: 0, kind: input, shape index: {}]
  %s1 = inlined_call_operand.vmem [shape: bf16[48,32], index: 1, kind: input, shape index: {}]
  %s2 = inlined_call_operand.hbm [shape: f32[8,1024], index: 2, kind: output, shape index: {}]
  %s3 = sld [smem:[#allocation0]]
  $region18: #{tpu_custom_call.1} parent=0
    _
  %s5 = ssub.s32 1, %s3
  %s6 = scalar_select 0, %s5, %s3
  $region1: #{tpu_custom_call.1} parent=0
    #allocation2 [shape = 'u8[32768]{0}', space=vmem, size = 0x8000, scoped, tag = 'output window, operand 0, single buffered']
    #allocation3 [shape = 's32[1]{0}', space=sflag, size = 0x4, scoped, tag = 'scoped memory for tpu_custom_call.1']
    %7 = vsyncpa [#allocation3], 0
    // Predicated region
    $region2: #{tpu_custom_call.1} parent=1 // pred_check
      _
    $region3: #{tpu_custom_call.1} parent=1 // pred_check_branch
      %9 = sbr.rel (0) target = $region5
    $region4: #{tpu_custom_call.1} parent=1 // pred_region
      _
    $region5: #{tpu_custom_call.1} parent=1 // pred_fallthru
      _
    // Predicated region
    $region6: #{tpu_custom_call.1} parent=1 // pred_check
      _
    $region7: #{tpu_custom_call.1} parent=1 // pred_check_branch
      %11 = sbr.rel (0) target = $region9
    $region8: #{tpu_custom_call.1} parent=1 // pred_region
      _
    $region9: #{tpu_custom_call.1} parent=1 // pred_fallthru
      _
    %v13 = vld [vmem:[%s0] sm:$0xff]
    %v14 = vld [vmem:[%s0 + $0x8] sm:$0xff]
    %v15 = vpack.c.bf16 %v13, %v13
    %v16 = vpack.c.bf16 %v14, %v14
    %v17 = vunpack.c.l.bf16 %v15
    %v18 = vunpack.c.l.bf16 %v16
    %v19 = vsub.f32 %v13, %v17
    %v20 = vsub.f32 %v14, %v18
    %v21 = vpack.c.bf16 %v19, %v19
    %v22 = vpack.c.bf16 %v20, %v20
    %v23 = vunpack.c.l.bf16 %v21
    %v24 = vunpack.c.l.bf16 %v22
    %v25 = vsub.f32 %v19, %v23
    %v26 = vsub.f32 %v20, %v24
    %v27 = vpack.c.bf16 %v25, %v25
    %v28 = vpack.c.bf16 %v26, %v26
    %v29 = vld [vmem:[%s1] sm:$0xf]
    %v30 = vld [vmem:[%s1 + $0x4] sm:$0xf]
    %v31 = vld [vmem:[%s1 + $0x8] sm:$0xf]
    %v32 = vld [vmem:[%s1 + $0xc] sm:$0xf]
    %v33 = vld [vmem:[%s1 + $0x10] sm:$0xf]
    %v34 = vld [vmem:[%s1 + $0x14] sm:$0xf]
    %36 = vrot.lane.b32.xlu0 %v21, 16
    %v37 = vpop.permute.xlu0 %36
    %39 = vrot.lane.b32.xlu0 %v27, 32
    %v40 = vpop.permute.xlu0 %39
    %vm41 = vcmask 130048
    %v44 = vsel %vm41, %v15, %v37
    %vm45 = vcmask 261120
    %v47 = vsel %vm45, %v44, %v40
    %v54 = vunpack.c.l.b16 %v29
    %v55 = vunpack.c.l.b16 %v30
    %v56 = vunpack.c.l.b16 %v31
    %v57 = vunpack.c.l.b16 %v32
    %v58 = vunpack.c.l.b16 %v33
    %v59 = vunpack.c.l.b16 %v34
    %v60 = vpack.c.b16 %v55, %v54
    %v61 = vpack.c.b16 %v57, %v56
    %v62 = vpack.c.b16 %v59, %v58
    %vm66 = vcmask 392192
    %v67 = vsel %vm66, %v47, 0
    %69 = vmatprep.subr.bf16.mxu0 0
    %70 = vmatpush1.bf16.msra.mxu0 0
    %71 = vmatprep.subr.bf16.mxu0 0
    %72 = vmatpush1.bf16.msra.mxu0 0
    %73 = vmatprep.subr.bf16.mxu0 0
    %74 = vmatpush1.bf16.msra.mxu0 0
    %75 = vmatprep.subr.bf16.mxu0 0
    %76 = vmatpush1.bf16.msra.mxu0 0
    %77 = vmatprep.subr.bf16.mxu0 0
    %78 = vmatpush1.bf16.msra.mxu0 0
    %79 = vmatprep.subr.bf16.mxu0 0
    %80 = vmatpush1.bf16.msra.mxu0 %v62
    %81 = vmatprep.subr.bf16.mxu0 0
    %82 = vmatpush1.bf16.msra.mxu0 %v61
    %83 = vmatprep.subr.bf16.mxu0 0
    %84 = vmatpush1.bf16.msra.mxu0 %v60
    %85 = vmatprep.subr.bf16.mxu0 0
    %86 = vmatpush2.bf16.msra.mxu0 0
    %87 = vmatprep.subr.bf16.mxu0 0
    %88 = vmatpush2.bf16.msra.mxu0 0
    %89 = vmatprep.subr.bf16.mxu0 0
    %90 = vmatpush2.bf16.msra.mxu0 0
    %91 = vmatprep.subr.bf16.mxu0 0
    %92 = vmatpush2.bf16.msra.mxu0 0
    %93 = vmatprep.subr.bf16.mxu0 0
    %94 = vmatpush2.bf16.msra.mxu0 0
    %95 = vmatprep.subr.bf16.mxu0 0
    %96 = vmatpush2.bf16.msra.mxu0 0
    %97 = vmatprep.subr.bf16.mxu0 0
    %98 = vmatpush2.bf16.msra.mxu0 0
    %99 = vmatprep.subr.bf16.mxu0 0
    %100 = vmatpush2.bf16.msra.mxu0 0
    %101 = vmatprep.mubr.bf16.mxu0 0
    %102 = vmatmul.mubr.bf16.gmra.mxu0 %v67
    %v103 = vpop.f32.mrf.mxu0
    %v104 = vadd.f32 0.0, %v103
    %v105 = vpop.f32.mrf.mxu0
    %v106 = vpop.f32.mrf.mxu0
    %v107 = vpop.f32.mrf.mxu0
    %108 = vdwg.mxu0
    %110 = vrot.lane.b32.xlu0 %v15, 112
    %v111 = vpop.permute.xlu0 %110
    %112 = vrot.lane.b32.xlu0 %v27, 16
    %v113 = vpop.permute.xlu0 %112
    %v116 = vsel %vm41, %v111, %v21
    %v118 = vsel %vm45, %v116, %v113
    %v119 = vsel %vm66, %v118, 0
    %121 = vmatprep.subr.bf16.mxu0 0
    %122 = vmatpush1.bf16.msra.mxu0 0
    %123 = vmatprep.subr.bf16.mxu0 0
    %124 = vmatpush1.bf16.msra.mxu0 0
    %125 = vmatprep.subr.bf16.mxu0 0
    %126 = vmatpush1.bf16.msra.mxu0 0
    %127 = vmatprep.subr.bf16.mxu0 0
    %128 = vmatpush1.bf16.msra.mxu0 0
    %129 = vmatprep.subr.bf16.mxu0 0
    %130 = vmatpush1.bf16.msra.mxu0 0
    %131 = vmatprep.subr.bf16.mxu0 0
    %132 = vmatpush1.bf16.msra.mxu0 %v62
    %133 = vmatprep.subr.bf16.mxu0 0
    %134 = vmatpush1.bf16.msra.mxu0 %v61
    %135 = vmatprep.subr.bf16.mxu0 0
    %136 = vmatpush1.bf16.msra.mxu0 %v60
    %137 = vmatprep.subr.bf16.mxu0 0
    %138 = vmatpush2.bf16.msra.mxu0 0
    %139 = vmatprep.subr.bf16.mxu0 0
    %140 = vmatpush2.bf16.msra.mxu0 0
    %141 = vmatprep.subr.bf16.mxu0 0
    %142 = vmatpush2.bf16.msra.mxu0 0
    %143 = vmatprep.subr.bf16.mxu0 0
    %144 = vmatpush2.bf16.msra.mxu0 0
    %145 = vmatprep.subr.bf16.mxu0 0
    %146 = vmatpush2.bf16.msra.mxu0 0
    %147 = vmatprep.subr.bf16.mxu0 0
    %148 = vmatpush2.bf16.msra.mxu0 0
    %149 = vmatprep.subr.bf16.mxu0 0
    %150 = vmatpush2.bf16.msra.mxu0 0
    %151 = vmatprep.subr.bf16.mxu0 0
    %152 = vmatpush2.bf16.msra.mxu0 0
    %153 = vmatprep.mubr.bf16.mxu0 0
    %154 = vmatmul.mubr.bf16.gmra.mxu0 %v119
    %v155 = vpop.f32.mrf.mxu0
    %v156 = vadd.f32 0.0, %v155
    %v157 = vpop.f32.mrf.mxu0
    %v158 = vpop.f32.mrf.mxu0
    %v159 = vpop.f32.mrf.mxu0
    %160 = vdwg.mxu0
    %161 = vrot.lane.b32.xlu0 %v15, 96
    %v162 = vpop.permute.xlu0 %161
    %163 = vrot.lane.b32.xlu0 %v21, 112
    %v164 = vpop.permute.xlu0 %163
    %v167 = vsel %vm41, %v162, %v164
    %v169 = vsel %vm45, %v167, %v27
    %v170 = vsel %vm66, %v169, 0
    %172 = vmatprep.subr.bf16.mxu0 0
    %173 = vmatpush1.bf16.msra.mxu0 0
    %174 = vmatprep.subr.bf16.mxu0 0
    %175 = vmatpush1.bf16.msra.mxu0 0
    %176 = vmatprep.subr.bf16.mxu0 0
    %177 = vmatpush1.bf16.msra.mxu0 0
    %178 = vmatprep.subr.bf16.mxu0 0
    %179 = vmatpush1.bf16.msra.mxu0 0
    %180 = vmatprep.subr.bf16.mxu0 0
    %181 = vmatpush1.bf16.msra.mxu0 0
    %182 = vmatprep.subr.bf16.mxu0 0
    %183 = vmatpush1.bf16.msra.mxu0 %v62
    %184 = vmatprep.subr.bf16.mxu0 0
    %185 = vmatpush1.bf16.msra.mxu0 %v61
    %186 = vmatprep.subr.bf16.mxu0 0
    %187 = vmatpush1.bf16.msra.mxu0 %v60
    %188 = vmatprep.subr.bf16.mxu0 0
    %189 = vmatpush2.bf16.msra.mxu0 0
    %190 = vmatprep.subr.bf16.mxu0 0
    %191 = vmatpush2.bf16.msra.mxu0 0
    %192 = vmatprep.subr.bf16.mxu0 0
    %193 = vmatpush2.bf16.msra.mxu0 0
    %194 = vmatprep.subr.bf16.mxu0 0
    %195 = vmatpush2.bf16.msra.mxu0 0
    %196 = vmatprep.subr.bf16.mxu0 0
    %197 = vmatpush2.bf16.msra.mxu0 0
    %198 = vmatprep.subr.bf16.mxu0 0
    %199 = vmatpush2.bf16.msra.mxu0 0
    %200 = vmatprep.subr.bf16.mxu0 0
    %201 = vmatpush2.bf16.msra.mxu0 0
    %202 = vmatprep.subr.bf16.mxu0 0
    %203 = vmatpush2.bf16.msra.mxu0 0
    %204 = vmatprep.mubr.bf16.mxu0 0
    %205 = vmatmul.mubr.bf16.gmra.mxu0 %v170
    %v206 = vpop.f32.mrf.mxu0
    %v207 = vadd.f32 0.0, %v206
    %v208 = vpop.f32.mrf.mxu0
    %v209 = vpop.f32.mrf.mxu0
    %v210 = vpop.f32.mrf.mxu0
    %211 = vdwg.mxu0
    %212 = vrot.lane.b32.xlu0 %v15, 80
    %v213 = vpop.permute.xlu0 %212
    %214 = vrot.lane.b32.xlu0 %v21, 96
    %v215 = vpop.permute.xlu0 %214
    %216 = vrot.lane.b32.xlu0 %v27, 112
    %v217 = vpop.permute.xlu0 %216
    %v220 = vsel %vm41, %v213, %v215
    %v222 = vsel %vm45, %v220, %v217
    %v223 = vsel %vm66, %v222, 0
    %225 = vmatprep.subr.bf16.mxu0 0
    %226 = vmatpush1.bf16.msra.mxu0 0
    %227 = vmatprep.subr.bf16.mxu0 0
    %228 = vmatpush1.bf16.msra.mxu0 0
    %229 = vmatprep.subr.bf16.mxu0 0
    %230 = vmatpush1.bf16.msra.mxu0 0
    %231 = vmatprep.subr.bf16.mxu0 0
    %232 = vmatpush1.bf16.msra.mxu0 0
    %233 = vmatprep.subr.bf16.mxu0 0
    %234 = vmatpush1.bf16.msra.mxu0 0
    %235 = vmatprep.subr.bf16.mxu0 0
    %236 = vmatpush1.bf16.msra.mxu0 %v62
    %237 = vmatprep.subr.bf16.mxu0 0
    %238 = vmatpush1.bf16.msra.mxu0 %v61
    %239 = vmatprep.subr.bf16.mxu0 0
    %240 = vmatpush1.bf16.msra.mxu0 %v60
    %241 = vmatprep.subr.bf16.mxu0 0
    %242 = vmatpush2.bf16.msra.mxu0 0
    %243 = vmatprep.subr.bf16.mxu0 0
    %244 = vmatpush2.bf16.msra.mxu0 0
    %245 = vmatprep.subr.bf16.mxu0 0
    %246 = vmatpush2.bf16.msra.mxu0 0
    %247 = vmatprep.subr.bf16.mxu0 0
    %248 = vmatpush2.bf16.msra.mxu0 0
    %249 = vmatprep.subr.bf16.mxu0 0
    %250 = vmatpush2.bf16.msra.mxu0 0
    %251 = vmatprep.subr.bf16.mxu0 0
    %252 = vmatpush2.bf16.msra.mxu0 0
    %253 = vmatprep.subr.bf16.mxu0 0
    %254 = vmatpush2.bf16.msra.mxu0 0
    %255 = vmatprep.subr.bf16.mxu0 0
    %256 = vmatpush2.bf16.msra.mxu0 0
    %257 = vmatprep.mubr.bf16.mxu0 0
    %258 = vmatmul.mubr.bf16.gmra.mxu0 %v223
    %v259 = vpop.f32.mrf.mxu0
    %v260 = vadd.f32 0.0, %v259
    %v261 = vpop.f32.mrf.mxu0
    %v262 = vpop.f32.mrf.mxu0
    %v263 = vpop.f32.mrf.mxu0
    %264 = vdwg.mxu0
    %265 = vrot.lane.b32.xlu0 %v15, 64
    %v266 = vpop.permute.xlu0 %265
    %267 = vrot.lane.b32.xlu0 %v21, 80
    %v268 = vpop.permute.xlu0 %267
    %269 = vrot.lane.b32.xlu0 %v27, 96
    %v270 = vpop.permute.xlu0 %269
    %v273 = vsel %vm41, %v266, %v268
    %v275 = vsel %vm45, %v273, %v270
    %v276 = vsel %vm66, %v275, 0
    %278 = vmatprep.subr.bf16.mxu0 0
    %279 = vmatpush1.bf16.msra.mxu0 0
    %280 = vmatprep.subr.bf16.mxu0 0
    %281 = vmatpush1.bf16.msra.mxu0 0
    %282 = vmatprep.subr.bf16.mxu0 0
    %283 = vmatpush1.bf16.msra.mxu0 0
    %284 = vmatprep.subr.bf16.mxu0 0
    %285 = vmatpush1.bf16.msra.mxu0 0
    %286 = vmatprep.subr.bf16.mxu0 0
    %287 = vmatpush1.bf16.msra.mxu0 0
    %288 = vmatprep.subr.bf16.mxu0 0
    %289 = vmatpush1.bf16.msra.mxu0 %v62
    %290 = vmatprep.subr.bf16.mxu0 0
    %291 = vmatpush1.bf16.msra.mxu0 %v61
    %292 = vmatprep.subr.bf16.mxu0 0
    %293 = vmatpush1.bf16.msra.mxu0 %v60
    %294 = vmatprep.subr.bf16.mxu0 0
    %295 = vmatpush2.bf16.msra.mxu0 0
    %296 = vmatprep.subr.bf16.mxu0 0
    %297 = vmatpush2.bf16.msra.mxu0 0
    %298 = vmatprep.subr.bf16.mxu0 0
    %299 = vmatpush2.bf16.msra.mxu0 0
    %300 = vmatprep.subr.bf16.mxu0 0
    %301 = vmatpush2.bf16.msra.mxu0 0
    %302 = vmatprep.subr.bf16.mxu0 0
    %303 = vmatpush2.bf16.msra.mxu0 0
    %304 = vmatprep.subr.bf16.mxu0 0
    %305 = vmatpush2.bf16.msra.mxu0 0
    %306 = vmatprep.subr.bf16.mxu0 0
    %307 = vmatpush2.bf16.msra.mxu0 0
    %308 = vmatprep.subr.bf16.mxu0 0
    %309 = vmatpush2.bf16.msra.mxu0 0
    %310 = vmatprep.mubr.bf16.mxu0 0
    %311 = vmatmul.mubr.bf16.gmra.mxu0 %v276
    %v312 = vpop.f32.mrf.mxu0
    %v313 = vadd.f32 0.0, %v312
    %v314 = vpop.f32.mrf.mxu0
    %v315 = vpop.f32.mrf.mxu0
    %v316 = vpop.f32.mrf.mxu0
    %317 = vdwg.mxu0
    %318 = vrot.lane.b32.xlu0 %v15, 48
    %v319 = vpop.permute.xlu0 %318
    %320 = vrot.lane.b32.xlu0 %v21, 64
    %v321 = vpop.permute.xlu0 %320
    %322 = vrot.lane.b32.xlu0 %v27, 80
    %v323 = vpop.permute.xlu0 %322
    %v326 = vsel %vm41, %v319, %v321
    %v328 = vsel %vm45, %v326, %v323
    %v329 = vsel %vm66, %v328, 0
    %331 = vmatprep.subr.bf16.mxu0 0
    %332 = vmatpush1.bf16.msra.mxu0 0
    %333 = vmatprep.subr.bf16.mxu0 0
    %334 = vmatpush1.bf16.msra.mxu0 0
    %335 = vmatprep.subr.bf16.mxu0 0
    %336 = vmatpush1.bf16.msra.mxu0 0
    %337 = vmatprep.subr.bf16.mxu0 0
    %338 = vmatpush1.bf16.msra.mxu0 0
    %339 = vmatprep.subr.bf16.mxu0 0
    %340 = vmatpush1.bf16.msra.mxu0 0
    %341 = vmatprep.subr.bf16.mxu0 0
    %342 = vmatpush1.bf16.msra.mxu0 %v62
    %343 = vmatprep.subr.bf16.mxu0 0
    %344 = vmatpush1.bf16.msra.mxu0 %v61
    %345 = vmatprep.subr.bf16.mxu0 0
    %346 = vmatpush1.bf16.msra.mxu0 %v60
    %347 = vmatprep.subr.bf16.mxu0 0
    %348 = vmatpush2.bf16.msra.mxu0 0
    %349 = vmatprep.subr.bf16.mxu0 0
    %350 = vmatpush2.bf16.msra.mxu0 0
    %351 = vmatprep.subr.bf16.mxu0 0
    %352 = vmatpush2.bf16.msra.mxu0 0
    %353 = vmatprep.subr.bf16.mxu0 0
    %354 = vmatpush2.bf16.msra.mxu0 0
    %355 = vmatprep.subr.bf16.mxu0 0
    %356 = vmatpush2.bf16.msra.mxu0 0
    %357 = vmatprep.subr.bf16.mxu0 0
    %358 = vmatpush2.bf16.msra.mxu0 0
    %359 = vmatprep.subr.bf16.mxu0 0
    %360 = vmatpush2.bf16.msra.mxu0 0
    %361 = vmatprep.subr.bf16.mxu0 0
    %362 = vmatpush2.bf16.msra.mxu0 0
    %363 = vmatprep.mubr.bf16.mxu0 0
    %364 = vmatmul.mubr.bf16.gmra.mxu0 %v329
    %v365 = vpop.f32.mrf.mxu0
    %v366 = vadd.f32 0.0, %v365
    %v367 = vpop.f32.mrf.mxu0
    %v368 = vpop.f32.mrf.mxu0
    %v369 = vpop.f32.mrf.mxu0
    %370 = vdwg.mxu0
    %371 = vrot.lane.b32.xlu0 %v15, 32
    %v372 = vpop.permute.xlu0 %371
    %373 = vrot.lane.b32.xlu0 %v21, 48
    %v374 = vpop.permute.xlu0 %373
    %375 = vrot.lane.b32.xlu0 %v27, 64
    %v376 = vpop.permute.xlu0 %375
    %v379 = vsel %vm41, %v372, %v374
    %v381 = vsel %vm45, %v379, %v376
    %v382 = vsel %vm66, %v381, 0
    %384 = vmatprep.subr.bf16.mxu0 0
    %385 = vmatpush1.bf16.msra.mxu0 0
    %386 = vmatprep.subr.bf16.mxu0 0
    %387 = vmatpush1.bf16.msra.mxu0 0
    %388 = vmatprep.subr.bf16.mxu0 0
    %389 = vmatpush1.bf16.msra.mxu0 0
    %390 = vmatprep.subr.bf16.mxu0 0
    %391 = vmatpush1.bf16.msra.mxu0 0
    %392 = vmatprep.subr.bf16.mxu0 0
    %393 = vmatpush1.bf16.msra.mxu0 0
    %394 = vmatprep.subr.bf16.mxu0 0
    %395 = vmatpush1.bf16.msra.mxu0 %v62
    %396 = vmatprep.subr.bf16.mxu0 0
    %397 = vmatpush1.bf16.msra.mxu0 %v61
    %398 = vmatprep.subr.bf16.mxu0 0
    %399 = vmatpush1.bf16.msra.mxu0 %v60
    %400 = vmatprep.subr.bf16.mxu0 0
    %401 = vmatpush2.bf16.msra.mxu0 0
    %402 = vmatprep.subr.bf16.mxu0 0
    %403 = vmatpush2.bf16.msra.mxu0 0
    %404 = vmatprep.subr.bf16.mxu0 0
    %405 = vmatpush2.bf16.msra.mxu0 0
    %406 = vmatprep.subr.bf16.mxu0 0
    %407 = vmatpush2.bf16.msra.mxu0 0
    %408 = vmatprep.subr.bf16.mxu0 0
    %409 = vmatpush2.bf16.msra.mxu0 0
    %410 = vmatprep.subr.bf16.mxu0 0
    %411 = vmatpush2.bf16.msra.mxu0 0
    %412 = vmatprep.subr.bf16.mxu0 0
    %413 = vmatpush2.bf16.msra.mxu0 0
    %414 = vmatprep.subr.bf16.mxu0 0
    %415 = vmatpush2.bf16.msra.mxu0 0
    %416 = vmatprep.mubr.bf16.mxu0 0
    %417 = vmatmul.mubr.bf16.gmra.mxu0 %v382
    %v418 = vpop.f32.mrf.mxu0
    %v419 = vadd.f32 0.0, %v418
    %v420 = vpop.f32.mrf.mxu0
    %v421 = vpop.f32.mrf.mxu0
    %v422 = vpop.f32.mrf.mxu0
    %423 = vdwg.mxu0
    %424 = vrot.lane.b32.xlu0 %v15, 16
    %v425 = vpop.permute.xlu0 %424
    %426 = vrot.lane.b32.xlu0 %v21, 32
    %v427 = vpop.permute.xlu0 %426
    %428 = vrot.lane.b32.xlu0 %v27, 48
    %v429 = vpop.permute.xlu0 %428
    %v432 = vsel %vm41, %v425, %v427
    %v434 = vsel %vm45, %v432, %v429
    %v435 = vsel %vm66, %v434, 0
    %437 = vmatprep.subr.bf16.mxu0 0
    %438 = vmatpush1.bf16.msra.mxu0 0
    %439 = vmatprep.subr.bf16.mxu0 0
    %440 = vmatpush1.bf16.msra.mxu0 0
    %441 = vmatprep.subr.bf16.mxu0 0
    %442 = vmatpush1.bf16.msra.mxu0 0
    %443 = vmatprep.subr.bf16.mxu0 0
    %444 = vmatpush1.bf16.msra.mxu0 0
    %445 = vmatprep.subr.bf16.mxu0 0
    %446 = vmatpush1.bf16.msra.mxu0 0
    %447 = vmatprep.subr.bf16.mxu0 0
    %448 = vmatpush1.bf16.msra.mxu0 %v62
    %449 = vmatprep.subr.bf16.mxu0 0
    %450 = vmatpush1.bf16.msra.mxu0 %v61
    %451 = vmatprep.subr.bf16.mxu0 0
    %452 = vmatpush1.bf16.msra.mxu0 %v60
    %453 = vmatprep.subr.bf16.mxu0 0
    %454 = vmatpush2.bf16.msra.mxu0 0
    %455 = vmatprep.subr.bf16.mxu0 0
    %456 = vmatpush2.bf16.msra.mxu0 0
    %457 = vmatprep.subr.bf16.mxu0 0
    %458 = vmatpush2.bf16.msra.mxu0 0
    %459 = vmatprep.subr.bf16.mxu0 0
    %460 = vmatpush2.bf16.msra.mxu0 0
    %461 = vmatprep.subr.bf16.mxu0 0
    %462 = vmatpush2.bf16.msra.mxu0 0
    %463 = vmatprep.subr.bf16.mxu0 0
    %464 = vmatpush2.bf16.msra.mxu0 0
    %465 = vmatprep.subr.bf16.mxu0 0
    %466 = vmatpush2.bf16.msra.mxu0 0
    %467 = vmatprep.subr.bf16.mxu0 0
    %468 = vmatpush2.bf16.msra.mxu0 0
    %469 = vmatprep.mubr.bf16.mxu0 0
    %470 = vmatmul.mubr.bf16.gmra.mxu0 %v435
    %v471 = vpop.f32.mrf.mxu0
    %v472 = vadd.f32 0.0, %v471
    %v473 = vpop.f32.mrf.mxu0
    %v474 = vpop.f32.mrf.mxu0
    %v475 = vpop.f32.mrf.mxu0
    %476 = vdwg.mxu0
    %478 = vrot.lane.b32.xlu0 %v22, 16
    %v479 = vpop.permute.xlu0 %478
    %481 = vrot.lane.b32.xlu0 %v28, 32
    %v482 = vpop.permute.xlu0 %481
    %v485 = vsel %vm41, %v16, %v479
    %v487 = vsel %vm45, %v485, %v482
    %v488 = vsel %vm66, %v487, 0
    %490 = vmatprep.subr.bf16.mxu0 0
    %491 = vmatpush1.bf16.msra.mxu0 0
    %492 = vmatprep.subr.bf16.mxu0 0
    %493 = vmatpush1.bf16.msra.mxu0 0
    %494 = vmatprep.subr.bf16.mxu0 0
    %495 = vmatpush1.bf16.msra.mxu0 0
    %496 = vmatprep.subr.bf16.mxu0 0
    %497 = vmatpush1.bf16.msra.mxu0 0
    %498 = vmatprep.subr.bf16.mxu0 0
    %499 = vmatpush1.bf16.msra.mxu0 0
    %500 = vmatprep.subr.bf16.mxu0 0
    %501 = vmatpush1.bf16.msra.mxu0 %v62
    %502 = vmatprep.subr.bf16.mxu0 0
    %503 = vmatpush1.bf16.msra.mxu0 %v61
    %504 = vmatprep.subr.bf16.mxu0 0
    %505 = vmatpush1.bf16.msra.mxu0 %v60
    %506 = vmatprep.subr.bf16.mxu0 0
    %507 = vmatpush2.bf16.msra.mxu0 0
    %508 = vmatprep.subr.bf16.mxu0 0
    %509 = vmatpush2.bf16.msra.mxu0 0
    %510 = vmatprep.subr.bf16.mxu0 0
    %511 = vmatpush2.bf16.msra.mxu0 0
    %512 = vmatprep.subr.bf16.mxu0 0
    %513 = vmatpush2.bf16.msra.mxu0 0
    %514 = vmatprep.subr.bf16.mxu0 0
    %515 = vmatpush2.bf16.msra.mxu0 0
    %516 = vmatprep.subr.bf16.mxu0 0
    %517 = vmatpush2.bf16.msra.mxu0 0
    %518 = vmatprep.subr.bf16.mxu0 0
    %519 = vmatpush2.bf16.msra.mxu0 0
    %520 = vmatprep.subr.bf16.mxu0 0
    %521 = vmatpush2.bf16.msra.mxu0 0
    %522 = vmatprep.mubr.bf16.mxu0 0
    %523 = vmatmul.mubr.bf16.gmra.mxu0 %v488
    %v524 = vpop.f32.mrf.mxu0
    %v525 = vadd.f32 0.0, %v524
    %v526 = vpop.f32.mrf.mxu0
    %v527 = vpop.f32.mrf.mxu0
    %v528 = vpop.f32.mrf.mxu0
    %529 = vdwg.mxu0
    %531 = vrot.lane.b32.xlu0 %v16, 112
    %v532 = vpop.permute.xlu0 %531
    %533 = vrot.lane.b32.xlu0 %v28, 16
    %v534 = vpop.permute.xlu0 %533
    %v537 = vsel %vm41, %v532, %v22
    %v539 = vsel %vm45, %v537, %v534
    %v540 = vsel %vm66, %v539, 0
    %542 = vmatprep.subr.bf16.mxu0 0
    %543 = vmatpush1.bf16.msra.mxu0 0
    %544 = vmatprep.subr.bf16.mxu0 0
    %545 = vmatpush1.bf16.msra.mxu0 0
    %546 = vmatprep.subr.bf16.mxu0 0
    %547 = vmatpush1.bf16.msra.mxu0 0
    %548 = vmatprep.subr.bf16.mxu0 0
    %549 = vmatpush1.bf16.msra.mxu0 0
    %550 = vmatprep.subr.bf16.mxu0 0
    %551 = vmatpush1.bf16.msra.mxu0 0
    %552 = vmatprep.subr.bf16.mxu0 0
    %553 = vmatpush1.bf16.msra.mxu0 %v62
    %554 = vmatprep.subr.bf16.mxu0 0
    %555 = vmatpush1.bf16.msra.mxu0 %v61
    %556 = vmatprep.subr.bf16.mxu0 0
    %557 = vmatpush1.bf16.msra.mxu0 %v60
    %558 = vmatprep.subr.bf16.mxu0 0
    %559 = vmatpush2.bf16.msra.mxu0 0
    %560 = vmatprep.subr.bf16.mxu0 0
    %561 = vmatpush2.bf16.msra.mxu0 0
    %562 = vmatprep.subr.bf16.mxu0 0
    %563 = vmatpush2.bf16.msra.mxu0 0
    %564 = vmatprep.subr.bf16.mxu0 0
    %565 = vmatpush2.bf16.msra.mxu0 0
    %566 = vmatprep.subr.bf16.mxu0 0
    %567 = vmatpush2.bf16.msra.mxu0 0
    %568 = vmatprep.subr.bf16.mxu0 0
    %569 = vmatpush2.bf16.msra.mxu0 0
    %570 = vmatprep.subr.bf16.mxu0 0
    %571 = vmatpush2.bf16.msra.mxu0 0
    %572 = vmatprep.subr.bf16.mxu0 0
    %573 = vmatpush2.bf16.msra.mxu0 0
    %574 = vmatprep.mubr.bf16.mxu0 0
    %575 = vmatmul.mubr.bf16.gmra.mxu0 %v540
    %v576 = vpop.f32.mrf.mxu0
    %v577 = vadd.f32 0.0, %v576
    %v578 = vpop.f32.mrf.mxu0
    %v579 = vpop.f32.mrf.mxu0
    %v580 = vpop.f32.mrf.mxu0
    %581 = vdwg.mxu0
    %582 = vrot.lane.b32.xlu0 %v16, 96
    %v583 = vpop.permute.xlu0 %582
    %584 = vrot.lane.b32.xlu0 %v22, 112
    %v585 = vpop.permute.xlu0 %584
    %v588 = vsel %vm41, %v583, %v585
    %v590 = vsel %vm45, %v588, %v28
    %v591 = vsel %vm66, %v590, 0
    %593 = vmatprep.subr.bf16.mxu0 0
    %594 = vmatpush1.bf16.msra.mxu0 0
    %595 = vmatprep.subr.bf16.mxu0 0
    %596 = vmatpush1.bf16.msra.mxu0 0
    %597 = vmatprep.subr.bf16.mxu0 0
    %598 = vmatpush1.bf16.msra.mxu0 0
    %599 = vmatprep.subr.bf16.mxu0 0
    %600 = vmatpush1.bf16.msra.mxu0 0
    %601 = vmatprep.subr.bf16.mxu0 0
    %602 = vmatpush1.bf16.msra.mxu0 0
    %603 = vmatprep.subr.bf16.mxu0 0
    %604 = vmatpush1.bf16.msra.mxu0 %v62
    %605 = vmatprep.subr.bf16.mxu0 0
    %606 = vmatpush1.bf16.msra.mxu0 %v61
    %607 = vmatprep.subr.bf16.mxu0 0
    %608 = vmatpush1.bf16.msra.mxu0 %v60
    %609 = vmatprep.subr.bf16.mxu0 0
    %610 = vmatpush2.bf16.msra.mxu0 0
    %611 = vmatprep.subr.bf16.mxu0 0
    %612 = vmatpush2.bf16.msra.mxu0 0
    %613 = vmatprep.subr.bf16.mxu0 0
    %614 = vmatpush2.bf16.msra.mxu0 0
    %615 = vmatprep.subr.bf16.mxu0 0
    %616 = vmatpush2.bf16.msra.mxu0 0
    %617 = vmatprep.subr.bf16.mxu0 0
    %618 = vmatpush2.bf16.msra.mxu0 0
    %619 = vmatprep.subr.bf16.mxu0 0
    %620 = vmatpush2.bf16.msra.mxu0 0
    %621 = vmatprep.subr.bf16.mxu0 0
    %622 = vmatpush2.bf16.msra.mxu0 0
    %623 = vmatprep.subr.bf16.mxu0 0
    %624 = vmatpush2.bf16.msra.mxu0 0
    %625 = vmatprep.mubr.bf16.mxu0 0
    %626 = vmatmul.mubr.bf16.gmra.mxu0 %v591
    %v627 = vpop.f32.mrf.mxu0
    %v628 = vadd.f32 0.0, %v627
    %v629 = vpop.f32.mrf.mxu0
    %v630 = vpop.f32.mrf.mxu0
    %v631 = vpop.f32.mrf.mxu0
    %632 = vdwg.mxu0
    %633 = vrot.lane.b32.xlu0 %v16, 80
    %v634 = vpop.permute.xlu0 %633
    %635 = vrot.lane.b32.xlu0 %v22, 96
    %v636 = vpop.permute.xlu0 %635
    %637 = vrot.lane.b32.xlu0 %v28, 112
    %v638 = vpop.permute.xlu0 %637
    %v641 = vsel %vm41, %v634, %v636
    %v643 = vsel %vm45, %v641, %v638
    %v644 = vsel %vm66, %v643, 0
    %646 = vmatprep.subr.bf16.mxu0 0
    %647 = vmatpush1.bf16.msra.mxu0 0
    %648 = vmatprep.subr.bf16.mxu0 0
    %649 = vmatpush1.bf16.msra.mxu0 0
    %650 = vmatprep.subr.bf16.mxu0 0
    %651 = vmatpush1.bf16.msra.mxu0 0
    %652 = vmatprep.subr.bf16.mxu0 0
    %653 = vmatpush1.bf16.msra.mxu0 0
    %654 = vmatprep.subr.bf16.mxu0 0
    %655 = vmatpush1.bf16.msra.mxu0 0
    %656 = vmatprep.subr.bf16.mxu0 0
    %657 = vmatpush1.bf16.msra.mxu0 %v62
    %658 = vmatprep.subr.bf16.mxu0 0
    %659 = vmatpush1.bf16.msra.mxu0 %v61
    %660 = vmatprep.subr.bf16.mxu0 0
    %661 = vmatpush1.bf16.msra.mxu0 %v60
    %662 = vmatprep.subr.bf16.mxu0 0
    %663 = vmatpush2.bf16.msra.mxu0 0
    %664 = vmatprep.subr.bf16.mxu0 0
    %665 = vmatpush2.bf16.msra.mxu0 0
    %666 = vmatprep.subr.bf16.mxu0 0
    %667 = vmatpush2.bf16.msra.mxu0 0
    %668 = vmatprep.subr.bf16.mxu0 0
    %669 = vmatpush2.bf16.msra.mxu0 0
    %670 = vmatprep.subr.bf16.mxu0 0
    %671 = vmatpush2.bf16.msra.mxu0 0
    %672 = vmatprep.subr.bf16.mxu0 0
    %673 = vmatpush2.bf16.msra.mxu0 0
    %674 = vmatprep.subr.bf16.mxu0 0
    %675 = vmatpush2.bf16.msra.mxu0 0
    %676 = vmatprep.subr.bf16.mxu0 0
    %677 = vmatpush2.bf16.msra.mxu0 0
    %678 = vmatprep.mubr.bf16.mxu0 0
    %679 = vmatmul.mubr.bf16.gmra.mxu0 %v644
    %v680 = vpop.f32.mrf.mxu0
    %v681 = vadd.f32 0.0, %v680
    %v682 = vpop.f32.mrf.mxu0
    %v683 = vpop.f32.mrf.mxu0
    %v684 = vpop.f32.mrf.mxu0
    %685 = vdwg.mxu0
    %686 = vrot.lane.b32.xlu0 %v16, 64
    %v687 = vpop.permute.xlu0 %686
    %688 = vrot.lane.b32.xlu0 %v22, 80
    %v689 = vpop.permute.xlu0 %688
    %690 = vrot.lane.b32.xlu0 %v28, 96
    %v691 = vpop.permute.xlu0 %690
    %v694 = vsel %vm41, %v687, %v689
    %v696 = vsel %vm45, %v694, %v691
    %v697 = vsel %vm66, %v696, 0
    %699 = vmatprep.subr.bf16.mxu0 0
    %700 = vmatpush1.bf16.msra.mxu0 0
    %701 = vmatprep.subr.bf16.mxu0 0
    %702 = vmatpush1.bf16.msra.mxu0 0
    %703 = vmatprep.subr.bf16.mxu0 0
    %704 = vmatpush1.bf16.msra.mxu0 0
    %705 = vmatprep.subr.bf16.mxu0 0
    %706 = vmatpush1.bf16.msra.mxu0 0
    %707 = vmatprep.subr.bf16.mxu0 0
    %708 = vmatpush1.bf16.msra.mxu0 0
    %709 = vmatprep.subr.bf16.mxu0 0
    %710 = vmatpush1.bf16.msra.mxu0 %v62
    %711 = vmatprep.subr.bf16.mxu0 0
    %712 = vmatpush1.bf16.msra.mxu0 %v61
    %713 = vmatprep.subr.bf16.mxu0 0
    %714 = vmatpush1.bf16.msra.mxu0 %v60
    %715 = vmatprep.subr.bf16.mxu0 0
    %716 = vmatpush2.bf16.msra.mxu0 0
    %717 = vmatprep.subr.bf16.mxu0 0
    %718 = vmatpush2.bf16.msra.mxu0 0
    %719 = vmatprep.subr.bf16.mxu0 0
    %720 = vmatpush2.bf16.msra.mxu0 0
    %721 = vmatprep.subr.bf16.mxu0 0
    %722 = vmatpush2.bf16.msra.mxu0 0
    %723 = vmatprep.subr.bf16.mxu0 0
    %724 = vmatpush2.bf16.msra.mxu0 0
    %725 = vmatprep.subr.bf16.mxu0 0
    %726 = vmatpush2.bf16.msra.mxu0 0
    %727 = vmatprep.subr.bf16.mxu0 0
    %728 = vmatpush2.bf16.msra.mxu0 0
    %729 = vmatprep.subr.bf16.mxu0 0
    %730 = vmatpush2.bf16.msra.mxu0 0
    %731 = vmatprep.mubr.bf16.mxu0 0
    %732 = vmatmul.mubr.bf16.gmra.mxu0 %v697
    %v733 = vpop.f32.mrf.mxu0
    %v734 = vadd.f32 0.0, %v733
    %v735 = vpop.f32.mrf.mxu0
    %v736 = vpop.f32.mrf.mxu0
    %v737 = vpop.f32.mrf.mxu0
    %738 = vdwg.mxu0
    %739 = vrot.lane.b32.xlu0 %v16, 48
    %v740 = vpop.permute.xlu0 %739
    %741 = vrot.lane.b32.xlu0 %v22, 64
    %v742 = vpop.permute.xlu0 %741
    %743 = vrot.lane.b32.xlu0 %v28, 80
    %v744 = vpop.permute.xlu0 %743
    %v747 = vsel %vm41, %v740, %v742
    %v749 = vsel %vm45, %v747, %v744
    %v750 = vsel %vm66, %v749, 0
    %752 = vmatprep.subr.bf16.mxu0 0
    %753 = vmatpush1.bf16.msra.mxu0 0
    %754 = vmatprep.subr.bf16.mxu0 0
    %755 = vmatpush1.bf16.msra.mxu0 0
    %756 = vmatprep.subr.bf16.mxu0 0
    %757 = vmatpush1.bf16.msra.mxu0 0
    %758 = vmatprep.subr.bf16.mxu0 0
    %759 = vmatpush1.bf16.msra.mxu0 0
    %760 = vmatprep.subr.bf16.mxu0 0
    %761 = vmatpush1.bf16.msra.mxu0 0
    %762 = vmatprep.subr.bf16.mxu0 0
    %763 = vmatpush1.bf16.msra.mxu0 %v62
    %764 = vmatprep.subr.bf16.mxu0 0
    %765 = vmatpush1.bf16.msra.mxu0 %v61
    %766 = vmatprep.subr.bf16.mxu0 0
    %767 = vmatpush1.bf16.msra.mxu0 %v60
    %768 = vmatprep.subr.bf16.mxu0 0
    %769 = vmatpush2.bf16.msra.mxu0 0
    %770 = vmatprep.subr.bf16.mxu0 0
    %771 = vmatpush2.bf16.msra.mxu0 0
    %772 = vmatprep.subr.bf16.mxu0 0
    %773 = vmatpush2.bf16.msra.mxu0 0
    %774 = vmatprep.subr.bf16.mxu0 0
    %775 = vmatpush2.bf16.msra.mxu0 0
    %776 = vmatprep.subr.bf16.mxu0 0
    %777 = vmatpush2.bf16.msra.mxu0 0
    %778 = vmatprep.subr.bf16.mxu0 0
    %779 = vmatpush2.bf16.msra.mxu0 0
    %780 = vmatprep.subr.bf16.mxu0 0
    %781 = vmatpush2.bf16.msra.mxu0 0
    %782 = vmatprep.subr.bf16.mxu0 0
    %783 = vmatpush2.bf16.msra.mxu0 0
    %784 = vmatprep.mubr.bf16.mxu0 0
    %785 = vmatmul.mubr.bf16.gmra.mxu0 %v750
    %v786 = vpop.f32.mrf.mxu0
    %v787 = vadd.f32 0.0, %v786
    %v788 = vpop.f32.mrf.mxu0
    %v789 = vpop.f32.mrf.mxu0
    %v790 = vpop.f32.mrf.mxu0
    %791 = vdwg.mxu0
    %792 = vrot.lane.b32.xlu0 %v16, 32
    %v793 = vpop.permute.xlu0 %792
    %794 = vrot.lane.b32.xlu0 %v22, 48
    %v795 = vpop.permute.xlu0 %794
    %796 = vrot.lane.b32.xlu0 %v28, 64
    %v797 = vpop.permute.xlu0 %796
    %v800 = vsel %vm41, %v793, %v795
    %v802 = vsel %vm45, %v800, %v797
    %v803 = vsel %vm66, %v802, 0
    %805 = vmatprep.subr.bf16.mxu0 0
    %806 = vmatpush1.bf16.msra.mxu0 0
    %807 = vmatprep.subr.bf16.mxu0 0
    %808 = vmatpush1.bf16.msra.mxu0 0
    %809 = vmatprep.subr.bf16.mxu0 0
    %810 = vmatpush1.bf16.msra.mxu0 0
    %811 = vmatprep.subr.bf16.mxu0 0
    %812 = vmatpush1.bf16.msra.mxu0 0
    %813 = vmatprep.subr.bf16.mxu0 0
    %814 = vmatpush1.bf16.msra.mxu0 0
    %815 = vmatprep.subr.bf16.mxu0 0
    %816 = vmatpush1.bf16.msra.mxu0 %v62
    %817 = vmatprep.subr.bf16.mxu0 0
    %818 = vmatpush1.bf16.msra.mxu0 %v61
    %819 = vmatprep.subr.bf16.mxu0 0
    %820 = vmatpush1.bf16.msra.mxu0 %v60
    %821 = vmatprep.subr.bf16.mxu0 0
    %822 = vmatpush2.bf16.msra.mxu0 0
    %823 = vmatprep.subr.bf16.mxu0 0
    %824 = vmatpush2.bf16.msra.mxu0 0
    %825 = vmatprep.subr.bf16.mxu0 0
    %826 = vmatpush2.bf16.msra.mxu0 0
    %827 = vmatprep.subr.bf16.mxu0 0
    %828 = vmatpush2.bf16.msra.mxu0 0
    %829 = vmatprep.subr.bf16.mxu0 0
    %830 = vmatpush2.bf16.msra.mxu0 0
    %831 = vmatprep.subr.bf16.mxu0 0
    %832 = vmatpush2.bf16.msra.mxu0 0
    %833 = vmatprep.subr.bf16.mxu0 0
    %834 = vmatpush2.bf16.msra.mxu0 0
    %835 = vmatprep.subr.bf16.mxu0 0
    %836 = vmatpush2.bf16.msra.mxu0 0
    %837 = vmatprep.mubr.bf16.mxu0 0
    %838 = vmatmul.mubr.bf16.gmra.mxu0 %v803
    %v839 = vpop.f32.mrf.mxu0
    %v840 = vadd.f32 0.0, %v839
    %v841 = vpop.f32.mrf.mxu0
    %v842 = vpop.f32.mrf.mxu0
    %v843 = vpop.f32.mrf.mxu0
    %844 = vdwg.mxu0
    %845 = vrot.lane.b32.xlu0 %v16, 16
    %v846 = vpop.permute.xlu0 %845
    %847 = vrot.lane.b32.xlu0 %v22, 32
    %v848 = vpop.permute.xlu0 %847
    %849 = vrot.lane.b32.xlu0 %v28, 48
    %v850 = vpop.permute.xlu0 %849
    %v853 = vsel %vm41, %v846, %v848
    %v855 = vsel %vm45, %v853, %v850
    %v856 = vsel %vm66, %v855, 0
    %858 = vmatprep.subr.bf16.mxu0 0
    %859 = vmatpush1.bf16.msra.mxu0 0
    %860 = vmatprep.subr.bf16.mxu0 0
    %861 = vmatpush1.bf16.msra.mxu0 0
    %862 = vmatprep.subr.bf16.mxu0 0
    %863 = vmatpush1.bf16.msra.mxu0 0
    %864 = vmatprep.subr.bf16.mxu0 0
    %865 = vmatpush1.bf16.msra.mxu0 0
    %866 = vmatprep.subr.bf16.mxu0 0
    %867 = vmatpush1.bf16.msra.mxu0 0
    %868 = vmatprep.subr.bf16.mxu0 0
    %869 = vmatpush1.bf16.msra.mxu0 %v62
    %870 = vmatprep.subr.bf16.mxu0 0
    %871 = vmatpush1.bf16.msra.mxu0 %v61
    %872 = vmatprep.subr.bf16.mxu0 0
    %873 = vmatpush1.bf16.msra.mxu0 %v60
    %874 = vmatprep.subr.bf16.mxu0 0
    %875 = vmatpush2.bf16.msra.mxu0 0
    %876 = vmatprep.subr.bf16.mxu0 0
    %877 = vmatpush2.bf16.msra.mxu0 0
    %878 = vmatprep.subr.bf16.mxu0 0
    %879 = vmatpush2.bf16.msra.mxu0 0
    %880 = vmatprep.subr.bf16.mxu0 0
    %881 = vmatpush2.bf16.msra.mxu0 0
    %882 = vmatprep.subr.bf16.mxu0 0
    %883 = vmatpush2.bf16.msra.mxu0 0
    %884 = vmatprep.subr.bf16.mxu0 0
    %885 = vmatpush2.bf16.msra.mxu0 0
    %886 = vmatprep.subr.bf16.mxu0 0
    %887 = vmatpush2.bf16.msra.mxu0 0
    %888 = vmatprep.subr.bf16.mxu0 0
    %889 = vmatpush2.bf16.msra.mxu0 0
    %890 = vmatprep.mubr.bf16.mxu0 0
    %891 = vmatmul.mubr.bf16.gmra.mxu0 %v856
    %v892 = vpop.f32.mrf.mxu0
    %v893 = vadd.f32 0.0, %v892
    %v894 = vpop.f32.mrf.mxu0
    %v895 = vpop.f32.mrf.mxu0
    %v896 = vpop.f32.mrf.mxu0
    %897 = vdwg.mxu0
    %899 = vrot.lane.b32.xlu0 %v104, 32
    %v900 = vpop.permute.xlu0 %899
    %903 = vrot.lane.b32.xlu0 %v156, 64
    %v904 = vpop.permute.xlu0 %903
    %906 = vrot.lane.b32.xlu0 %v156, 96
    %v907 = vpop.permute.xlu0 %906
    %910 = vrot.lane.b32.xlu0 %v207, 32
    %v911 = vpop.permute.xlu0 %910
    %914 = vrot.lane.b32.xlu0 %v260, 64
    %v915 = vpop.permute.xlu0 %914
    %917 = vrot.lane.b32.xlu0 %v260, 96
    %v918 = vpop.permute.xlu0 %917
    %921 = vrot.lane.b32.xlu0 %v313, 32
    %v922 = vpop.permute.xlu0 %921
    %925 = vrot.lane.b32.xlu0 %v366, 64
    %v926 = vpop.permute.xlu0 %925
    %928 = vrot.lane.b32.xlu0 %v366, 96
    %v929 = vpop.permute.xlu0 %928
    %932 = vrot.lane.b32.xlu0 %v419, 32
    %v933 = vpop.permute.xlu0 %932
    %936 = vrot.lane.b32.xlu0 %v472, 64
    %v937 = vpop.permute.xlu0 %936
    %939 = vrot.lane.b32.xlu0 %v472, 96
    %v940 = vpop.permute.xlu0 %939
    %v942 = vsel %vm45, %v104, %v900
    %vm943 = vcmask 523264
    %v944 = vsel %vm943, %v942, %v904
    %vm945 = vcmask 785408
    %v946 = vsel %vm945, %v944, %v907
    %v947 = vsel %vm45, %v207, %v911
    %v948 = vsel %vm943, %v947, %v915
    %v949 = vsel %vm945, %v948, %v918
    %v950 = vsel %vm45, %v313, %v922
    %v951 = vsel %vm943, %v950, %v926
    %v952 = vsel %vm945, %v951, %v929
    %v953 = vsel %vm45, %v419, %v933
    %v954 = vsel %vm943, %v953, %v937
    %v955 = vsel %vm945, %v954, %v940
    %957 = vrot.lane.b32.xlu0 %v525, 32
    %v958 = vpop.permute.xlu0 %957
    %961 = vrot.lane.b32.xlu0 %v577, 64
    %v962 = vpop.permute.xlu0 %961
    %964 = vrot.lane.b32.xlu0 %v577, 96
    %v965 = vpop.permute.xlu0 %964
    %968 = vrot.lane.b32.xlu0 %v628, 32
    %v969 = vpop.permute.xlu0 %968
    %972 = vrot.lane.b32.xlu0 %v681, 64
    %v973 = vpop.permute.xlu0 %972
    %975 = vrot.lane.b32.xlu0 %v681, 96
    %v976 = vpop.permute.xlu0 %975
    %979 = vrot.lane.b32.xlu0 %v734, 32
    %v980 = vpop.permute.xlu0 %979
    %983 = vrot.lane.b32.xlu0 %v787, 64
    %v984 = vpop.permute.xlu0 %983
    %986 = vrot.lane.b32.xlu0 %v787, 96
    %v987 = vpop.permute.xlu0 %986
    %990 = vrot.lane.b32.xlu0 %v840, 32
    %v991 = vpop.permute.xlu0 %990
    %994 = vrot.lane.b32.xlu0 %v893, 64
    %v995 = vpop.permute.xlu0 %994
    %997 = vrot.lane.b32.xlu0 %v893, 96
    %v998 = vpop.permute.xlu0 %997
    %v1000 = vsel %vm45, %v525, %v958
    %v1001 = vsel %vm943, %v1000, %v962
    %v1002 = vsel %vm945, %v1001, %v965
    %v1003 = vsel %vm45, %v628, %v969
    %v1004 = vsel %vm943, %v1003, %v973
    %v1005 = vsel %vm945, %v1004, %v976
    %v1006 = vsel %vm45, %v734, %v980
    %v1007 = vsel %vm943, %v1006, %v984
    %v1008 = vsel %vm945, %v1007, %v987
    %v1009 = vsel %vm45, %v840, %v991
    %v1010 = vsel %vm943, %v1009, %v995
    %v1011 = vsel %vm945, %v1010, %v998
    %1012 = vst [vmem:[#allocation2] sm:$0xff] %v946
    %1013 = vst [vmem:[#allocation2 + $0x8] sm:$0xff] %v949
    %1014 = vst [vmem:[#allocation2 + $0x10] sm:$0xff] %v952
    %1015 = vst [vmem:[#allocation2 + $0x18] sm:$0xff] %v955
    %1016 = vst [vmem:[#allocation2 + $0x20] sm:$0xff] %v1002
    %1017 = vst [vmem:[#allocation2 + $0x28] sm:$0xff] %v1005
    %1018 = vst [vmem:[#allocation2 + $0x30] sm:$0xff] %v1008
    %1019 = vst [vmem:[#allocation2 + $0x38] sm:$0xff] %v1011
    // Predicated region
    $region10: #{tpu_custom_call.1} parent=1 // pred_check
      _
    $region11: #{tpu_custom_call.1} parent=1 // pred_check_branch
      %1021 = sbr.rel (0) target = $region13
    $region12: #{tpu_custom_call.1} parent=1 // pred_region
      %s1023 = ssub.s32 1024, 1024
      %1024 = vsyncadd [#allocation3], %s1023
      %s1026 = sshll.u32 [#allocation2], 4
      %s1027 = int_to_ptr.vmem [resolvable:$true] %s1026
      %1029 = dma.vmem_to_hbm [thread:$0]  %s1027, 1024, %s2, [#allocation3]
    $region13: #{tpu_custom_call.1} parent=1 // pred_fallthru
      _
    // Predicated region
    $region14: #{tpu_custom_call.1} parent=1 // pred_check
      _
    $region15: #{tpu_custom_call.1} parent=1 // pred_check_branch
      %1031 = sbr.rel (0) target = $region17
    $region16: #{tpu_custom_call.1} parent=1 // pred_region
      %1032 = dma.done [#allocation3], 1024
    $region17: #{tpu_custom_call.1} parent=1 // pred_fallthru
      _
    %1033 = vsyncpa [#allocation3], 1

</llo_original>
